<compile_context>
chip_gen: v6e
topology: v6e:2x2x1
jax: 0.10.0
libtpu: 0.0.40
codegen_flags: <defaults>
</compile_context>

<pallas_src>
import functools

import jax
import jax.numpy as jnp
from jax import lax
from jax.experimental import pallas as pl
from jax.experimental.pallas import tpu as pltpu


def _attention_kernel(ht_ref, hs_ref, wa_ref, wc1_ref, wc2_ref, b_ref, o_ref,
                      c_ref, *, batch, t_len, s_len):
    # ht_ref: (B*T, H), hs_ref: (B*S, H), wa: (H, H),
    # wc1/wc2: (H, O) (split of W_c along its first axis), b: (1, O)
    # c_ref: VMEM scratch (B*T, H) holding the context vectors of all batches.
    ht = ht_ref[...]                               # (B*T, H)
    hs = hs_ref[...]                               # (B*S, H)

    # Shared-weight matmul fused over all batches: (B*S, H) @ (H, H).
    hs_wa = jnp.dot(hs, wa_ref[...], preferred_element_type=jnp.float32)

    # Per-batch score / softmax / P@V. batch is a compile-time constant, so this
    # Python loop is unrolled; all slices are static and sublane-aligned (T,S=8).
    for bi in range(batch):
        ht_b = ht[bi * t_len:(bi + 1) * t_len, :]          # (T, H)
        hs_b = hs[bi * s_len:(bi + 1) * s_len, :]          # (S, H)
        hswa_b = hs_wa[bi * s_len:(bi + 1) * s_len, :]     # (S, H)

        # score = ht_b @ hswa_b^T, contracting last dims directly (no .T copy).
        score = lax.dot_general(
            ht_b, hswa_b,
            dimension_numbers=(((1,), (1,)), ((), ())),
            preferred_element_type=jnp.float32)            # (T, S)

        # numerically-stable softmax over the source-sequence axis
        score = score - jnp.max(score, axis=-1, keepdims=True)
        p = jnp.exp(score)
        denom = jnp.sum(p, axis=-1, keepdims=True)
        # approx=False keeps exact f32 parity; approx=True uses the EUP vrcp slot.
        a = p * pl.reciprocal(denom, approx=False)         # (T, S)

        # c = a @ hs_b  (context vectors for this batch)
        c_ref[bi * t_len:(bi + 1) * t_len, :] = jnp.dot(
            a, hs_b, preferred_element_type=jnp.float32)   # (T, H)

    # Output projection fused over all batches; concat avoided via W_c split:
    #   tanh([c, ht] @ W_c + b) == tanh(c @ W_c[:H] + ht @ W_c[H:] + b)
    out = jnp.tanh(
        jnp.dot(c_ref[...], wc1_ref[...], preferred_element_type=jnp.float32)
        + jnp.dot(ht, wc2_ref[...], preferred_element_type=jnp.float32)
        + b_ref[...])
    o_ref[...] = out.astype(o_ref.dtype)


def attention_forward(ht, hs, W_a, W_c, b):
    """ht: (T, B, H), hs: (S, B, H), W_a: (H, H), W_c: (2H, O), b: (O,)
    returns (T, B, O) — same convention as the PyTorch module (source=None)."""
    T, B, H = ht.shape
    S = hs.shape[0]
    O = W_c.shape[1]

    # Layout plumbing only: present batch-fused, sublane-aligned 2-D slabs to the
    # kernel. XLA fuses this transpose+reshape into the pallas_call operand copy;
    # at realistic sizes fold the layout into the producer instead.
    ht2 = jnp.transpose(ht, (1, 0, 2)).reshape(B * T, H)    # (B*T, H)
    hs2 = jnp.transpose(hs, (1, 0, 2)).reshape(B * S, H)    # (B*S, H)
    wc1 = W_c[:H]                                           # (H, O)  acts on c
    wc2 = W_c[H:]                                           # (H, O)  acts on ht
    b2d = b.reshape(1, O)

    kernel = functools.partial(_attention_kernel, batch=B, t_len=T, s_len=S)

    out2 = pl.pallas_call(
        kernel,
        out_shape=jax.ShapeDtypeStruct((B * T, O), ht.dtype),
        grid=(1,),  # single invocation: all batches processed in one step
        in_specs=[
            pl.BlockSpec((B * T, H), lambda i: (0, 0)),     # ht (batch-fused)
            pl.BlockSpec((B * S, H), lambda i: (0, 0)),     # hs (batch-fused)
            pl.BlockSpec((H, H), lambda i: (0, 0)),         # W_a
            pl.BlockSpec((H, O), lambda i: (0, 0)),         # W_c[:H]
            pl.BlockSpec((H, O), lambda i: (0, 0)),         # W_c[H:]
            pl.BlockSpec((1, O), lambda i: (0, 0)),         # b
        ],
        out_specs=pl.BlockSpec((B * T, O), lambda i: (0, 0)),
        scratch_shapes=[pltpu.VMEM((B * T, H), jnp.float32)],
        compiler_params=pltpu.CompilerParams(
            dimension_semantics=("arbitrary",),
        ),
    )(ht2, hs2, W_a, wc1, wc2, b2d)

    return out2.reshape(B, T, O).transpose(1, 0, 2)          # (T, B, O)


def _reference(ht, hs, W_a, W_c, b):
    # pure-JAX reference mirroring the torch forward (source=None)
    score = jnp.einsum('jik,kl->jil', hs, W_a)
    score = jnp.einsum('jik,lik->jil', ht, score)
    score = score - jnp.max(score, axis=-1, keepdims=True)
    score = jnp.exp(score)
    a = score / jnp.sum(score, axis=-1, keepdims=True)
    c = jnp.einsum('jik,kil->jil', a, hs)
    h = jnp.concatenate((c, ht), axis=-1)
    return jnp.tanh(jnp.einsum('jik,kl->jil', h, W_c) + b)


if __name__ == "__main__":
    # Small shapes consistent with the module's forward:
    #   ht, hs: (sequence, batch, hidden)
    T, S, B, H, O = 8, 8, 2, 32, 16

    key = jax.random.PRNGKey(0)
    k_ht, k_hs, k_wa, k_wc = jax.random.split(key, 4)

    ht = jax.random.normal(k_ht, (T, B, H), dtype=jnp.float32)
    hs = jax.random.normal(k_hs, (S, B, H), dtype=jnp.float32)

    # Deterministic xavier_normal_ init (matches torch gain=1.0 semantics)
    std_wa = (2.0 / (H + H)) ** 0.5
    std_wc = (2.0 / (2 * H + O)) ** 0.5
    W_a = std_wa * jax.random.normal(k_wa, (H, H), dtype=jnp.float32)
    W_c = std_wc * jax.random.normal(k_wc, (2 * H, O), dtype=jnp.float32)
    b = jnp.zeros((O,), dtype=jnp.float32)

    out = attention_forward(ht, hs, W_a, W_c, b)
    out = jax.block_until_ready(out)

    ref = _reference(ht, hs, W_a, W_c, b)
    assert out.shape == (T, B, O)
    assert jnp.allclose(out, ref, atol=1e-5, rtol=1e-5), "mismatch vs reference"

    print("KERNEL_OK")
</pallas_src>

<mosaic_0001>
module attributes {stable_mosaic.version = 11 : i64} {
  func.func @_attention_kernel(%arg0: i32, %arg1: memref<16x32xf32, #tpu.memory_space<vmem>>, %arg2: memref<16x32xf32, #tpu.memory_space<vmem>>, %arg3: memref<32x32xf32, #tpu.memory_space<vmem>>, %arg4: memref<32x16xf32, #tpu.memory_space<vmem>>, %arg5: memref<32x16xf32, #tpu.memory_space<vmem>>, %arg6: memref<1x16xf32, #tpu.memory_space<vmem>>, %arg7: memref<16x16xf32, #tpu.memory_space<vmem>>, %arg8: memref<16x32xf32, #tpu.memory_space<vmem>>) attributes {dimension_semantics = [#tpu.dimension_semantics<arbitrary>], iteration_bounds = array<i64: 1>, scalar_prefetch = 0 : i64, scratch_operands = 1 : i64, tpu.core_type = #tpu.core_type<tc>, window_params = [{pipeline_mode = #tpu.pipeline_mode<synchronous>, transform_indices = @transform_0, window_bounds = array<i64: 16, 32>}, {pipeline_mode = #tpu.pipeline_mode<synchronous>, transform_indices = @transform_1, window_bounds = array<i64: 16, 32>}, {pipeline_mode = #tpu.pipeline_mode<synchronous>, transform_indices = @transform_2, window_bounds = array<i64: 32, 32>}, {pipeline_mode = #tpu.pipeline_mode<synchronous>, transform_indices = @transform_3, window_bounds = array<i64: 32, 16>}, {pipeline_mode = #tpu.pipeline_mode<synchronous>, transform_indices = @transform_4, window_bounds = array<i64: 32, 16>}, {pipeline_mode = #tpu.pipeline_mode<synchronous>, transform_indices = @transform_5, window_bounds = array<i64: 1, 16>}, {pipeline_mode = #tpu.pipeline_mode<synchronous>, transform_indices = @transform_6, window_bounds = array<i64: 16, 16>}]} {
    %c0 = arith.constant 0 : index
    %c0_0 = arith.constant 0 : index
    %0 = vector.load %arg1[%c0, %c0_0] : memref<16x32xf32, #tpu.memory_space<vmem>>, vector<16x32xf32>
    %c0_1 = arith.constant 0 : index
    %c0_2 = arith.constant 0 : index
    %1 = vector.load %arg2[%c0_1, %c0_2] : memref<16x32xf32, #tpu.memory_space<vmem>>, vector<16x32xf32>
    %c0_3 = arith.constant 0 : index
    %c0_4 = arith.constant 0 : index
    %2 = vector.load %arg3[%c0_3, %c0_4] : memref<32x32xf32, #tpu.memory_space<vmem>>, vector<32x32xf32>
    %cst = arith.constant dense<0.000000e+00> : vector<16x32xf32>
    %3 = tpu.matmul %1, %2, %cst {dimension_numbers = #tpu.dot_dimension_numbers<[1], [0], [0], [1], [0, 0, 1, 1], [], []>} : vector<16x32xf32>, vector<32x32xf32>, vector<16x32xf32> -> vector<16x32xf32>
    %4 = vector.extract_strided_slice %0 {offsets = [0, 0], sizes = [8, 32], strides = [1, 1]} : vector<16x32xf32> to vector<8x32xf32>
    %5 = vector.extract_strided_slice %1 {offsets = [0, 0], sizes = [8, 32], strides = [1, 1]} : vector<16x32xf32> to vector<8x32xf32>
    %6 = vector.extract_strided_slice %3 {offsets = [0, 0], sizes = [8, 32], strides = [1, 1]} : vector<16x32xf32> to vector<8x32xf32>
    %cst_5 = arith.constant dense<0.000000e+00> : vector<8x8xf32>
    %7 = tpu.matmul %4, %6, %cst_5 {dimension_numbers = #tpu.dot_dimension_numbers<[1], [1], [0], [0], [0, 0, 1, 0], [], []>} : vector<8x32xf32>, vector<8x32xf32>, vector<8x8xf32> -> vector<8x8xf32>
    %cst_6 = arith.constant dense<0xFF800000> : vector<8xf32>
    %8 = vector.multi_reduction <maximumf>, %7, %cst_6 [1] : vector<8x8xf32> to vector<8xf32>
    %9 = vector.shape_cast %8 : vector<8xf32> to vector<8x1xf32>
    %10 = vector.broadcast %9 : vector<8x1xf32> to vector<8x8xf32>
    %11 = arith.subf %7, %10 : vector<8x8xf32>
    %12 = math.exp %11 : vector<8x8xf32>
    %cst_7 = arith.constant dense<0.000000e+00> : vector<8xf32>
    %13 = vector.multi_reduction <add>, %12, %cst_7 [1] : vector<8x8xf32> to vector<8xf32>
    %14 = vector.shape_cast %13 : vector<8xf32> to vector<8x1xf32>
    %15 = tpu.reciprocal %14 : vector<8x1xf32> -> vector<8x1xf32>
    %16 = vector.broadcast %15 : vector<8x1xf32> to vector<8x8xf32>
    %17 = arith.mulf %12, %16 : vector<8x8xf32>
    %cst_8 = arith.constant dense<0.000000e+00> : vector<8x32xf32>
    %18 = tpu.matmul %17, %5, %cst_8 {dimension_numbers = #tpu.dot_dimension_numbers<[1], [0], [0], [1], [0, 0, 1, 1], [], []>} : vector<8x8xf32>, vector<8x32xf32>, vector<8x32xf32> -> vector<8x32xf32>
    %c0_9 = arith.constant 0 : index
    %c0_10 = arith.constant 0 : index
    %19 = vector.load %arg8[%c0_9, %c0_10] : memref<16x32xf32, #tpu.memory_space<vmem>>, vector<8x32xf32>
    tpu.vector_store %arg8[%c0_9, %c0_10], %18 {strides = array<i32>} : memref<16x32xf32, #tpu.memory_space<vmem>>, vector<8x32xf32>,
    %20 = vector.extract_strided_slice %0 {offsets = [8, 0], sizes = [8, 32], strides = [1, 1]} : vector<16x32xf32> to vector<8x32xf32>
    %21 = vector.extract_strided_slice %1 {offsets = [8, 0], sizes = [8, 32], strides = [1, 1]} : vector<16x32xf32> to vector<8x32xf32>
    %22 = vector.extract_strided_slice %3 {offsets = [8, 0], sizes = [8, 32], strides = [1, 1]} : vector<16x32xf32> to vector<8x32xf32>
    %cst_11 = arith.constant dense<0.000000e+00> : vector<8x8xf32>
    %23 = tpu.matmul %20, %22, %cst_11 {dimension_numbers = #tpu.dot_dimension_numbers<[1], [1], [0], [0], [0, 0, 1, 0], [], []>} : vector<8x32xf32>, vector<8x32xf32>, vector<8x8xf32> -> vector<8x8xf32>
    %cst_12 = arith.constant dense<0xFF800000> : vector<8xf32>
    %24 = vector.multi_reduction <maximumf>, %23, %cst_12 [1] : vector<8x8xf32> to vector<8xf32>
    %25 = vector.shape_cast %24 : vector<8xf32> to vector<8x1xf32>
    %26 = vector.broadcast %25 : vector<8x1xf32> to vector<8x8xf32>
    %27 = arith.subf %23, %26 : vector<8x8xf32>
    %28 = math.exp %27 : vector<8x8xf32>
    %cst_13 = arith.constant dense<0.000000e+00> : vector<8xf32>
    %29 = vector.multi_reduction <add>, %28, %cst_13 [1] : vector<8x8xf32> to vector<8xf32>
    %30 = vector.shape_cast %29 : vector<8xf32> to vector<8x1xf32>
    %31 = tpu.reciprocal %30 : vector<8x1xf32> -> vector<8x1xf32>
    %32 = vector.broadcast %31 : vector<8x1xf32> to vector<8x8xf32>
    %33 = arith.mulf %28, %32 : vector<8x8xf32>
    %cst_14 = arith.constant dense<0.000000e+00> : vector<8x32xf32>
    %34 = tpu.matmul %33, %21, %cst_14 {dimension_numbers = #tpu.dot_dimension_numbers<[1], [0], [0], [1], [0, 0, 1, 1], [], []>} : vector<8x8xf32>, vector<8x32xf32>, vector<8x32xf32> -> vector<8x32xf32>
    %c8 = arith.constant 8 : index
    %c0_15 = arith.constant 0 : index
    %35 = vector.load %arg8[%c8, %c0_15] : memref<16x32xf32, #tpu.memory_space<vmem>>, vector<8x32xf32>
    tpu.vector_store %arg8[%c8, %c0_15], %34 {strides = array<i32>} : memref<16x32xf32, #tpu.memory_space<vmem>>, vector<8x32xf32>,
    %c0_16 = arith.constant 0 : index
    %c0_17 = arith.constant 0 : index
    %36 = vector.load %arg8[%c0_16, %c0_17] : memref<16x32xf32, #tpu.memory_space<vmem>>, vector<16x32xf32>
    %c0_18 = arith.constant 0 : index
    %c0_19 = arith.constant 0 : index
    %37 = vector.load %arg4[%c0_18, %c0_19] : memref<32x16xf32, #tpu.memory_space<vmem>>, vector<32x16xf32>
    %cst_20 = arith.constant dense<0.000000e+00> : vector<16x16xf32>
    %38 = tpu.matmul %36, %37, %cst_20 {dimension_numbers = #tpu.dot_dimension_numbers<[1], [0], [0], [1], [0, 0, 1, 1], [], []>} : vector<16x32xf32>, vector<32x16xf32>, vector<16x16xf32> -> vector<16x16xf32>
    %c0_21 = arith.constant 0 : index
    %c0_22 = arith.constant 0 : index
    %39 = vector.load %arg5[%c0_21, %c0_22] : memref<32x16xf32, #tpu.memory_space<vmem>>, vector<32x16xf32>
    %cst_23 = arith.constant dense<0.000000e+00> : vector<16x16xf32>
    %40 = tpu.matmul %0, %39, %cst_23 {dimension_numbers = #tpu.dot_dimension_numbers<[1], [0], [0], [1], [0, 0, 1, 1], [], []>} : vector<16x32xf32>, vector<32x16xf32>, vector<16x16xf32> -> vector<16x16xf32>
    %41 = arith.addf %38, %40 : vector<16x16xf32>
    %c0_24 = arith.constant 0 : index
    %c0_25 = arith.constant 0 : index
    %42 = vector.load %arg6[%c0_24, %c0_25] : memref<1x16xf32, #tpu.memory_space<vmem>>, vector<1x16xf32>
    %43 = vector.broadcast %42 : vector<1x16xf32> to vector<16x16xf32>
    %44 = arith.addf %41, %43 : vector<16x16xf32>
    %45 = math.tanh %44 : vector<16x16xf32>
    %c0_26 = arith.constant 0 : index
    %c0_27 = arith.constant 0 : index
    %46 = vector.load %arg7[%c0_26, %c0_27] : memref<16x16xf32, #tpu.memory_space<vmem>>, vector<16x16xf32>
    tpu.vector_store %arg7[%c0_26, %c0_27], %45 {strides = array<i32>} : memref<16x16xf32, #tpu.memory_space<vmem>>, vector<16x16xf32>,
    return
  }
  func.func @transform_0(%arg0: i32) -> (i32, i32) {
    %c0_i32 = arith.constant 0 : i32
    %c0_i32_0 = arith.constant 0 : i32
    %c0_i32_1 = arith.constant 0 : i32
    return %c0_i32, %c0_i32_0 : i32, i32
  }
  func.func @transform_1(%arg0: i32) -> (i32, i32) {
    %c0_i32 = arith.constant 0 : i32
    %c0_i32_0 = arith.constant 0 : i32
    %c0_i32_1 = arith.constant 0 : i32
    return %c0_i32, %c0_i32_0 : i32, i32
  }
  func.func @transform_2(%arg0: i32) -> (i32, i32) {
    %c0_i32 = arith.constant 0 : i32
    %c0_i32_0 = arith.constant 0 : i32
    %c0_i32_1 = arith.constant 0 : i32
    return %c0_i32, %c0_i32_0 : i32, i32
  }
  func.func @transform_3(%arg0: i32) -> (i32, i32) {
    %c0_i32 = arith.constant 0 : i32
    %c0_i32_0 = arith.constant 0 : i32
    %c0_i32_1 = arith.constant 0 : i32
    return %c0_i32, %c0_i32_0 : i32, i32
  }
  func.func @transform_4(%arg0: i32) -> (i32, i32) {
    %c0_i32 = arith.constant 0 : i32
    %c0_i32_0 = arith.constant 0 : i32
    %c0_i32_1 = arith.constant 0 : i32
    return %c0_i32, %c0_i32_0 : i32, i32
  }
  func.func @transform_5(%arg0: i32) -> (i32, i32) {
    %c0_i32 = arith.constant 0 : i32
    %c0_i32_0 = arith.constant 0 : i32
    %c0_i32_1 = arith.constant 0 : i32
    return %c0_i32, %c0_i32_0 : i32, i32
  }
  func.func @transform_6(%arg0: i32) -> (i32, i32) {
    %c0_i32 = arith.constant 0 : i32
    %c0_i32_0 = arith.constant 0 : i32
    %c0_i32_1 = arith.constant 0 : i32
    return %c0_i32, %c0_i32_0 : i32, i32
  }
}

</mosaic_0001>

<llo_original>
// kernel: tpu_custom_call.1
$region0: #{tpu_custom_call.1}
  #allocation0 [shape = 'u32[]', space=smem, size = 0x4, offset = 0x4, fixed_abs, tag = 'smem constant byte address 0x4 - core index']
  #allocation1 [shape = 'u32[144,128]{1,0:T(1,128)}', space=vmem, size = 0x12000, scoped, tag = 'internal scratch']
  #allocation2 [shape = 'f32[16,32]{1,0:T(8,128)}', space=vmem, size = 0x2000, scoped, tag = 'scratch operand']
  %s0 = inlined_call_operand.vmem [shape: f32[16,32], index: 0, kind: input, shape index: {}]
  %s1 = inlined_call_operand.vmem [shape: f32[16,32], index: 1, kind: input, shape index: {}]
  %s2 = inlined_call_operand.vmem [shape: f32[32,32], index: 2, kind: input, shape index: {}]
  %s3 = inlined_call_operand.vmem [shape: f32[32,16], index: 3, kind: input, shape index: {}]
  %s4 = inlined_call_operand.vmem [shape: f32[32,16], index: 4, kind: input, shape index: {}]
  %s5 = inlined_call_operand.vmem [shape: f32[1,16], index: 5, kind: input, shape index: {}]
  %s6 = inlined_call_operand.hbm [shape: f32[16,16], index: 6, kind: output, shape index: {}]
  %s7 = sld [smem:[#allocation0]]
  $region34: #{tpu_custom_call.1} parent=0
    _
  %s9 = ssub.s32 1, %s7
  %s10 = scalar_select 0, %s9, %s7
  $region1: #{tpu_custom_call.1} parent=0
    #allocation3 [shape = 'u8[8192]{0}', space=vmem, size = 0x2000, scoped, tag = 'output window, operand 0, single buffered']
    #allocation4 [shape = 's32[1]{0}', space=sflag, size = 0x4, scoped, tag = 'scoped memory for tpu_custom_call.1']
    %11 = vsyncpa [#allocation4], 0
    // Predicated region
    $region2: #{tpu_custom_call.1} parent=1 // pred_check
      _
    $region3: #{tpu_custom_call.1} parent=1 // pred_check_branch
      %13 = sbr.rel (0) target = $region5
    $region4: #{tpu_custom_call.1} parent=1 // pred_region
      _
    $region5: #{tpu_custom_call.1} parent=1 // pred_fallthru
      _
    // Predicated region
    $region6: #{tpu_custom_call.1} parent=1 // pred_check
      _
    $region7: #{tpu_custom_call.1} parent=1 // pred_check_branch
      %15 = sbr.rel (0) target = $region9
    $region8: #{tpu_custom_call.1} parent=1 // pred_region
      _
    $region9: #{tpu_custom_call.1} parent=1 // pred_fallthru
      _
    // Predicated region
    $region10: #{tpu_custom_call.1} parent=1 // pred_check
      _
    $region11: #{tpu_custom_call.1} parent=1 // pred_check_branch
      %17 = sbr.rel (0) target = $region13
    $region12: #{tpu_custom_call.1} parent=1 // pred_region
      _
    $region13: #{tpu_custom_call.1} parent=1 // pred_fallthru
      _
    // Predicated region
    $region14: #{tpu_custom_call.1} parent=1 // pred_check
      _
    $region15: #{tpu_custom_call.1} parent=1 // pred_check_branch
      %19 = sbr.rel (0) target = $region17
    $region16: #{tpu_custom_call.1} parent=1 // pred_region
      _
    $region17: #{tpu_custom_call.1} parent=1 // pred_fallthru
      _
    // Predicated region
    $region18: #{tpu_custom_call.1} parent=1 // pred_check
      _
    $region19: #{tpu_custom_call.1} parent=1 // pred_check_branch
      %21 = sbr.rel (0) target = $region21
    $region20: #{tpu_custom_call.1} parent=1 // pred_region
      _
    $region21: #{tpu_custom_call.1} parent=1 // pred_fallthru
      _
    // Predicated region
    $region22: #{tpu_custom_call.1} parent=1 // pred_check
      _
    $region23: #{tpu_custom_call.1} parent=1 // pred_check_branch
      %23 = sbr.rel (0) target = $region25
    $region24: #{tpu_custom_call.1} parent=1 // pred_region
      _
    $region25: #{tpu_custom_call.1} parent=1 // pred_fallthru
      _
    %v24 = vld [vmem:[%s0] sm:$0xff]
    %v25 = vld [vmem:[%s0 + $0x8] sm:$0xff]
    %v26 = vld [vmem:[%s1] sm:$0xff]
    %v27 = vld [vmem:[%s1 + $0x8] sm:$0xff]
    %v28 = vld [vmem:[%s2] sm:$0xff]
    %v29 = vld [vmem:[%s2 + $0x8] sm:$0xff]
    %v30 = vld [vmem:[%s2 + $0x10] sm:$0xff]
    %v31 = vld [vmem:[%s2 + $0x18] sm:$0xff]
    %vm32 = vcmask 261120
    %v34 = vsel %vm32, %v26, 0
    %v37 = vsel %vm32, %v27, 0
    %39 = vmatprep.subr.mxu0 0.0
    %40 = vmatpush1.msra.mxu0 0.0
    %41 = vmatprep.subr.mxu0 0.0
    %42 = vmatpush1.msra.mxu0 0.0
    %43 = vmatprep.subr.mxu0 0.0
    %44 = vmatpush1.msra.mxu0 0.0
    %45 = vmatprep.subr.mxu0 0.0
    %46 = vmatpush1.msra.mxu0 0.0
    %47 = vmatprep.subr.mxu0 0.0
    %48 = vmatpush1.msra.mxu0 0.0
    %49 = vmatprep.subr.mxu0 0.0
    %50 = vmatpush1.msra.mxu0 0.0
    %51 = vmatprep.subr.mxu0 0.0
    %52 = vmatpush1.msra.mxu0 0.0
    %53 = vmatprep.subr.mxu0 0.0
    %54 = vmatpush1.msra.mxu0 0.0
    %55 = vmatprep.subr.mxu0 0.0
    %56 = vmatpush1.msra.mxu0 0.0
    %57 = vmatprep.subr.mxu0 0.0
    %58 = vmatpush1.msra.mxu0 0.0
    %59 = vmatprep.subr.mxu0 0.0
    %60 = vmatpush1.msra.mxu0 0.0
    %61 = vmatprep.subr.mxu0 0.0
    %62 = vmatpush1.msra.mxu0 0.0
    %63 = vmatprep.subr.mxu0 0.0
    %64 = vmatpush1.msra.mxu0 %v31
    %65 = vmatprep.subr.mxu0 0.0
    %66 = vmatpush1.msra.mxu0 %v30
    %67 = vmatprep.subr.mxu0 0.0
    %68 = vmatpush1.msra.mxu0 %v29
    %69 = vmatprep.subr.mxu0 0.0
    %70 = vmatpush1.msra.mxu0 %v28
    %71 = vmatprep.subr.mxu0 0.0
    %72 = vmatpush2.msra.mxu0 0.0
    %73 = vmatprep.subr.mxu0 0.0
    %74 = vmatpush2.msra.mxu0 0.0
    %75 = vmatprep.subr.mxu0 0.0
    %76 = vmatpush2.msra.mxu0 0.0
    %77 = vmatprep.subr.mxu0 0.0
    %78 = vmatpush2.msra.mxu0 0.0
    %79 = vmatprep.subr.mxu0 0.0
    %80 = vmatpush2.msra.mxu0 0.0
    %81 = vmatprep.subr.mxu0 0.0
    %82 = vmatpush2.msra.mxu0 0.0
    %83 = vmatprep.subr.mxu0 0.0
    %84 = vmatpush2.msra.mxu0 0.0
    %85 = vmatprep.subr.mxu0 0.0
    %86 = vmatpush2.msra.mxu0 0.0
    %87 = vmatprep.subr.mxu0 0.0
    %88 = vmatpush2.msra.mxu0 0.0
    %89 = vmatprep.subr.mxu0 0.0
    %90 = vmatpush2.msra.mxu0 0.0
    %91 = vmatprep.subr.mxu0 0.0
    %92 = vmatpush2.msra.mxu0 0.0
    %93 = vmatprep.subr.mxu0 0.0
    %94 = vmatpush2.msra.mxu0 0.0
    %95 = vmatprep.subr.mxu0 0.0
    %96 = vmatpush2.msra.mxu0 0.0
    %97 = vmatprep.subr.mxu0 0.0
    %98 = vmatpush2.msra.mxu0 0.0
    %99 = vmatprep.subr.mxu0 0.0
    %100 = vmatpush2.msra.mxu0 0.0
    %101 = vmatprep.subr.mxu0 0.0
    %102 = vmatpush2.msra.mxu0 0.0
    %103 = vmatprep.mubr.f32.mxu0 0.0
    %104 = vmatmul.mubr.f32.gmra.mxu0 %v34
    %v105 = vpop.f32.mrf.mxu0
    %v106 = vadd.f32 0.0, %v105
    %v107 = vpop.f32.mrf.mxu0
    %108 = vmatprep.mubr.f32.mxu0 0.0
    %109 = vmatmul.mubr.f32.gmra.mxu0 %v37
    %v110 = vpop.f32.mrf.mxu0
    %v111 = vadd.f32 0.0, %v110
    %v112 = vpop.f32.mrf.mxu0
    %113 = vdwg.mxu0
    %v115 = vsel %vm32, %v24, 0
    %v118 = vsel %vm32, %v106, 0
    %120 = vmatprep.subr.mxu0 0.0
    %121 = vmatpush1.xpose.msra.mxu0 0.0
    %122 = vmatprep.subr.mxu0 0.0
    %123 = vmatpush1.xpose.msra.mxu0 0.0
    %124 = vmatprep.subr.mxu0 0.0
    %125 = vmatpush1.xpose.msra.mxu0 0.0
    %126 = vmatprep.subr.mxu0 0.0
    %127 = vmatpush1.xpose.msra.mxu0 0.0
    %128 = vmatprep.subr.mxu0 0.0
    %129 = vmatpush1.xpose.msra.mxu0 0.0
    %130 = vmatprep.subr.mxu0 0.0
    %131 = vmatpush1.xpose.msra.mxu0 0.0
    %132 = vmatprep.subr.mxu0 0.0
    %133 = vmatpush1.xpose.msra.mxu0 0.0
    %134 = vmatprep.subr.mxu0 0.0
    %135 = vmatpush1.xpose.msra.mxu0 0.0
    %136 = vmatprep.subr.mxu0 0.0
    %137 = vmatpush1.xpose.msra.mxu0 0.0
    %138 = vmatprep.subr.mxu0 0.0
    %139 = vmatpush1.xpose.msra.mxu0 0.0
    %140 = vmatprep.subr.mxu0 0.0
    %141 = vmatpush1.xpose.msra.mxu0 0.0
    %142 = vmatprep.subr.mxu0 0.0
    %143 = vmatpush1.xpose.msra.mxu0 0.0
    %144 = vmatprep.subr.mxu0 0.0
    %145 = vmatpush1.xpose.msra.mxu0 0.0
    %146 = vmatprep.subr.mxu0 0.0
    %147 = vmatpush1.xpose.msra.mxu0 0.0
    %148 = vmatprep.subr.mxu0 0.0
    %149 = vmatpush1.xpose.msra.mxu0 0.0
    %150 = vmatprep.subr.mxu0 0.0
    %151 = vmatpush1.xpose.msra.mxu0 %v118
    %152 = vmatprep.subr.mxu0 0.0
    %153 = vmatpush2.xpose.msra.mxu0 0.0
    %154 = vmatprep.subr.mxu0 0.0
    %155 = vmatpush2.xpose.msra.mxu0 0.0
    %156 = vmatprep.subr.mxu0 0.0
    %157 = vmatpush2.xpose.msra.mxu0 0.0
    %158 = vmatprep.subr.mxu0 0.0
    %159 = vmatpush2.xpose.msra.mxu0 0.0
    %160 = vmatprep.subr.mxu0 0.0
    %161 = vmatpush2.xpose.msra.mxu0 0.0
    %162 = vmatprep.subr.mxu0 0.0
    %163 = vmatpush2.xpose.msra.mxu0 0.0
    %164 = vmatprep.subr.mxu0 0.0
    %165 = vmatpush2.xpose.msra.mxu0 0.0
    %166 = vmatprep.subr.mxu0 0.0
    %167 = vmatpush2.xpose.msra.mxu0 0.0
    %168 = vmatprep.subr.mxu0 0.0
    %169 = vmatpush2.xpose.msra.mxu0 0.0
    %170 = vmatprep.subr.mxu0 0.0
    %171 = vmatpush2.xpose.msra.mxu0 0.0
    %172 = vmatprep.subr.mxu0 0.0
    %173 = vmatpush2.xpose.msra.mxu0 0.0
    %174 = vmatprep.subr.mxu0 0.0
    %175 = vmatpush2.xpose.msra.mxu0 0.0
    %176 = vmatprep.subr.mxu0 0.0
    %177 = vmatpush2.xpose.msra.mxu0 0.0
    %178 = vmatprep.subr.mxu0 0.0
    %179 = vmatpush2.xpose.msra.mxu0 0.0
    %180 = vmatprep.subr.mxu0 0.0
    %181 = vmatpush2.xpose.msra.mxu0 0.0
    %182 = vmatprep.subr.mxu0 0.0
    %183 = vmatpush2.xpose.msra.mxu0 0.0
    %184 = vmatprep.mubr.f32.mxu0 0.0
    %185 = vmatmul.mubr.f32.gmra.mxu0 %v115
    %v186 = vpop.f32.mrf.mxu0
    %v187 = vadd.f32 0.0, %v186
    %v188 = vpop.f32.mrf.mxu0
    %189 = vdwg.mxu0
    %vm190 = vcmask 64512
    %v191 = vsel %vm190, %v187, -inf
    %192 = vmax.xlane.f32.xlu0 %v191
    %v193 = vpop.xlane.xlu0 %192
    %v194 = vsub.f32 %v187, %v193
    %v195 = vmul.f32 %v194, 1.442695
    %v196 = vpow.pop %v195
    %v197 = vsel %vm190, %v196, 0.0
    %198 = vadd.xlane.f32.xlu0 %v197
    %v199 = vpop.xlane.xlu0 %198
    %v200 = vrcp.pop %v199
    %v201 = vmul.f32 %v196, %v200
    %v203 = vsel %vm190, %v201, 0
    %205 = vmatprep.subr.mxu0 0.0
    %206 = vmatpush1.msra.mxu0 0.0
    %207 = vmatprep.subr.mxu0 0.0
    %208 = vmatpush1.msra.mxu0 0.0
    %209 = vmatprep.subr.mxu0 0.0
    %210 = vmatpush1.msra.mxu0 0.0
    %211 = vmatprep.subr.mxu0 0.0
    %212 = vmatpush1.msra.mxu0 0.0
    %213 = vmatprep.subr.mxu0 0.0
    %214 = vmatpush1.msra.mxu0 0.0
    %215 = vmatprep.subr.mxu0 0.0
    %216 = vmatpush1.msra.mxu0 0.0
    %217 = vmatprep.subr.mxu0 0.0
    %218 = vmatpush1.msra.mxu0 0.0
    %219 = vmatprep.subr.mxu0 0.0
    %220 = vmatpush1.msra.mxu0 0.0
    %221 = vmatprep.subr.mxu0 0.0
    %222 = vmatpush1.msra.mxu0 0.0
    %223 = vmatprep.subr.mxu0 0.0
    %224 = vmatpush1.msra.mxu0 0.0
    %225 = vmatprep.subr.mxu0 0.0
    %226 = vmatpush1.msra.mxu0 0.0
    %227 = vmatprep.subr.mxu0 0.0
    %228 = vmatpush1.msra.mxu0 0.0
    %229 = vmatprep.subr.mxu0 0.0
    %230 = vmatpush1.msra.mxu0 0.0
    %231 = vmatprep.subr.mxu0 0.0
    %232 = vmatpush1.msra.mxu0 0.0
    %233 = vmatprep.subr.mxu0 0.0
    %234 = vmatpush1.msra.mxu0 0.0
    %235 = vmatprep.subr.mxu0 0.0
    %236 = vmatpush1.msra.mxu0 %v26
    %237 = vmatprep.subr.mxu0 0.0
    %238 = vmatpush2.msra.mxu0 0.0
    %239 = vmatprep.subr.mxu0 0.0
    %240 = vmatpush2.msra.mxu0 0.0
    %241 = vmatprep.subr.mxu0 0.0
    %242 = vmatpush2.msra.mxu0 0.0
    %243 = vmatprep.subr.mxu0 0.0
    %244 = vmatpush2.msra.mxu0 0.0
    %245 = vmatprep.subr.mxu0 0.0
    %246 = vmatpush2.msra.mxu0 0.0
    %247 = vmatprep.subr.mxu0 0.0
    %248 = vmatpush2.msra.mxu0 0.0
    %249 = vmatprep.subr.mxu0 0.0
    %250 = vmatpush2.msra.mxu0 0.0
    %251 = vmatprep.subr.mxu0 0.0
    %252 = vmatpush2.msra.mxu0 0.0
    %253 = vmatprep.subr.mxu0 0.0
    %254 = vmatpush2.msra.mxu0 0.0
    %255 = vmatprep.subr.mxu0 0.0
    %256 = vmatpush2.msra.mxu0 0.0
    %257 = vmatprep.subr.mxu0 0.0
    %258 = vmatpush2.msra.mxu0 0.0
    %259 = vmatprep.subr.mxu0 0.0
    %260 = vmatpush2.msra.mxu0 0.0
    %261 = vmatprep.subr.mxu0 0.0
    %262 = vmatpush2.msra.mxu0 0.0
    %263 = vmatprep.subr.mxu0 0.0
    %264 = vmatpush2.msra.mxu0 0.0
    %265 = vmatprep.subr.mxu0 0.0
    %266 = vmatpush2.msra.mxu0 0.0
    %267 = vmatprep.subr.mxu0 0.0
    %268 = vmatpush2.msra.mxu0 0.0
    %269 = vmatprep.mubr.f32.mxu0 0.0
    %270 = vmatmul.mubr.f32.gmra.mxu0 %v203
    %v271 = vpop.f32.mrf.mxu0
    %v272 = vadd.f32 0.0, %v271
    %v273 = vpop.f32.mrf.mxu0
    %274 = vdwg.mxu0
    %275 = vst.msk [vmem:[#allocation2] sm:$0xff] %vm32, %v272
    %v277 = vsel %vm32, %v25, 0
    %v280 = vsel %vm32, %v111, 0
    %282 = vmatprep.subr.mxu0 0.0
    %283 = vmatpush1.xpose.msra.mxu0 0.0
    %284 = vmatprep.subr.mxu0 0.0
    %285 = vmatpush1.xpose.msra.mxu0 0.0
    %286 = vmatprep.subr.mxu0 0.0
    %287 = vmatpush1.xpose.msra.mxu0 0.0
    %288 = vmatprep.subr.mxu0 0.0
    %289 = vmatpush1.xpose.msra.mxu0 0.0
    %290 = vmatprep.subr.mxu0 0.0
    %291 = vmatpush1.xpose.msra.mxu0 0.0
    %292 = vmatprep.subr.mxu0 0.0
    %293 = vmatpush1.xpose.msra.mxu0 0.0
    %294 = vmatprep.subr.mxu0 0.0
    %295 = vmatpush1.xpose.msra.mxu0 0.0
    %296 = vmatprep.subr.mxu0 0.0
    %297 = vmatpush1.xpose.msra.mxu0 0.0
    %298 = vmatprep.subr.mxu0 0.0
    %299 = vmatpush1.xpose.msra.mxu0 0.0
    %300 = vmatprep.subr.mxu0 0.0
    %301 = vmatpush1.xpose.msra.mxu0 0.0
    %302 = vmatprep.subr.mxu0 0.0
    %303 = vmatpush1.xpose.msra.mxu0 0.0
    %304 = vmatprep.subr.mxu0 0.0
    %305 = vmatpush1.xpose.msra.mxu0 0.0
    %306 = vmatprep.subr.mxu0 0.0
    %307 = vmatpush1.xpose.msra.mxu0 0.0
    %308 = vmatprep.subr.mxu0 0.0
    %309 = vmatpush1.xpose.msra.mxu0 0.0
    %310 = vmatprep.subr.mxu0 0.0
    %311 = vmatpush1.xpose.msra.mxu0 0.0
    %312 = vmatprep.subr.mxu0 0.0
    %313 = vmatpush1.xpose.msra.mxu0 %v280
    %314 = vmatprep.subr.mxu0 0.0
    %315 = vmatpush2.xpose.msra.mxu0 0.0
    %316 = vmatprep.subr.mxu0 0.0
    %317 = vmatpush2.xpose.msra.mxu0 0.0
    %318 = vmatprep.subr.mxu0 0.0
    %319 = vmatpush2.xpose.msra.mxu0 0.0
    %320 = vmatprep.subr.mxu0 0.0
    %321 = vmatpush2.xpose.msra.mxu0 0.0
    %322 = vmatprep.subr.mxu0 0.0
    %323 = vmatpush2.xpose.msra.mxu0 0.0
    %324 = vmatprep.subr.mxu0 0.0
    %325 = vmatpush2.xpose.msra.mxu0 0.0
    %326 = vmatprep.subr.mxu0 0.0
    %327 = vmatpush2.xpose.msra.mxu0 0.0
    %328 = vmatprep.subr.mxu0 0.0
    %329 = vmatpush2.xpose.msra.mxu0 0.0
    %330 = vmatprep.subr.mxu0 0.0
    %331 = vmatpush2.xpose.msra.mxu0 0.0
    %332 = vmatprep.subr.mxu0 0.0
    %333 = vmatpush2.xpose.msra.mxu0 0.0
    %334 = vmatprep.subr.mxu0 0.0
    %335 = vmatpush2.xpose.msra.mxu0 0.0
    %336 = vmatprep.subr.mxu0 0.0
    %337 = vmatpush2.xpose.msra.mxu0 0.0
    %338 = vmatprep.subr.mxu0 0.0
    %339 = vmatpush2.xpose.msra.mxu0 0.0
    %340 = vmatprep.subr.mxu0 0.0
    %341 = vmatpush2.xpose.msra.mxu0 0.0
    %342 = vmatprep.subr.mxu0 0.0
    %343 = vmatpush2.xpose.msra.mxu0 0.0
    %344 = vmatprep.subr.mxu0 0.0
    %345 = vmatpush2.xpose.msra.mxu0 0.0
    %346 = vmatprep.mubr.f32.mxu0 0.0
    %347 = vmatmul.mubr.f32.gmra.mxu0 %v277
    %v348 = vpop.f32.mrf.mxu0
    %v349 = vadd.f32 0.0, %v348
    %v350 = vpop.f32.mrf.mxu0
    %351 = vdwg.mxu0
    %v352 = vsel %vm190, %v349, -inf
    %353 = vmax.xlane.f32.xlu0 %v352
    %v354 = vpop.xlane.xlu0 %353
    %v355 = vsub.f32 %v349, %v354
    %v356 = vmul.f32 %v355, 1.442695
    %v357 = vpow.pop %v356
    %v358 = vsel %vm190, %v357, 0.0
    %359 = vadd.xlane.f32.xlu0 %v358
    %v360 = vpop.xlane.xlu0 %359
    %v361 = vrcp.pop %v360
    %v362 = vmul.f32 %v357, %v361
    %v364 = vsel %vm190, %v362, 0
    %366 = vmatprep.subr.mxu0 0.0
    %367 = vmatpush1.msra.mxu0 0.0
    %368 = vmatprep.subr.mxu0 0.0
    %369 = vmatpush1.msra.mxu0 0.0
    %370 = vmatprep.subr.mxu0 0.0
    %371 = vmatpush1.msra.mxu0 0.0
    %372 = vmatprep.subr.mxu0 0.0
    %373 = vmatpush1.msra.mxu0 0.0
    %374 = vmatprep.subr.mxu0 0.0
    %375 = vmatpush1.msra.mxu0 0.0
    %376 = vmatprep.subr.mxu0 0.0
    %377 = vmatpush1.msra.mxu0 0.0
    %378 = vmatprep.subr.mxu0 0.0
    %379 = vmatpush1.msra.mxu0 0.0
    %380 = vmatprep.subr.mxu0 0.0
    %381 = vmatpush1.msra.mxu0 0.0
    %382 = vmatprep.subr.mxu0 0.0
    %383 = vmatpush1.msra.mxu0 0.0
    %384 = vmatprep.subr.mxu0 0.0
    %385 = vmatpush1.msra.mxu0 0.0
    %386 = vmatprep.subr.mxu0 0.0
    %387 = vmatpush1.msra.mxu0 0.0
    %388 = vmatprep.subr.mxu0 0.0
    %389 = vmatpush1.msra.mxu0 0.0
    %390 = vmatprep.subr.mxu0 0.0
    %391 = vmatpush1.msra.mxu0 0.0
    %392 = vmatprep.subr.mxu0 0.0
    %393 = vmatpush1.msra.mxu0 0.0
    %394 = vmatprep.subr.mxu0 0.0
    %395 = vmatpush1.msra.mxu0 0.0
    %396 = vmatprep.subr.mxu0 0.0
    %397 = vmatpush1.msra.mxu0 %v27
    %398 = vmatprep.subr.mxu0 0.0
    %399 = vmatpush2.msra.mxu0 0.0
    %400 = vmatprep.subr.mxu0 0.0
    %401 = vmatpush2.msra.mxu0 0.0
    %402 = vmatprep.subr.mxu0 0.0
    %403 = vmatpush2.msra.mxu0 0.0
    %404 = vmatprep.subr.mxu0 0.0
    %405 = vmatpush2.msra.mxu0 0.0
    %406 = vmatprep.subr.mxu0 0.0
    %407 = vmatpush2.msra.mxu0 0.0
    %408 = vmatprep.subr.mxu0 0.0
    %409 = vmatpush2.msra.mxu0 0.0
    %410 = vmatprep.subr.mxu0 0.0
    %411 = vmatpush2.msra.mxu0 0.0
    %412 = vmatprep.subr.mxu0 0.0
    %413 = vmatpush2.msra.mxu0 0.0
    %414 = vmatprep.subr.mxu0 0.0
    %415 = vmatpush2.msra.mxu0 0.0
    %416 = vmatprep.subr.mxu0 0.0
    %417 = vmatpush2.msra.mxu0 0.0
    %418 = vmatprep.subr.mxu0 0.0
    %419 = vmatpush2.msra.mxu0 0.0
    %420 = vmatprep.subr.mxu0 0.0
    %421 = vmatpush2.msra.mxu0 0.0
    %422 = vmatprep.subr.mxu0 0.0
    %423 = vmatpush2.msra.mxu0 0.0
    %424 = vmatprep.subr.mxu0 0.0
    %425 = vmatpush2.msra.mxu0 0.0
    %426 = vmatprep.subr.mxu0 0.0
    %427 = vmatpush2.msra.mxu0 0.0
    %428 = vmatprep.subr.mxu0 0.0
    %429 = vmatpush2.msra.mxu0 0.0
    %430 = vmatprep.mubr.f32.mxu0 0.0
    %431 = vmatmul.mubr.f32.gmra.mxu0 %v364
    %v432 = vpop.f32.mrf.mxu0
    %v433 = vadd.f32 0.0, %v432
    %v434 = vpop.f32.mrf.mxu0
    %435 = vdwg.mxu0
    %436 = vst.msk [vmem:[#allocation2 + $0x8] sm:$0xff] %vm32, %v433
    %v437 = vld [vmem:[#allocation2] sm:$0xff]
    %v438 = vld [vmem:[#allocation2 + $0x8] sm:$0xff]
    %v439 = vld [vmem:[%s3] sm:$0xff]
    %v440 = vld [vmem:[%s3 + $0x8] sm:$0xff]
    %v441 = vld [vmem:[%s3 + $0x10] sm:$0xff]
    %v442 = vld [vmem:[%s3 + $0x18] sm:$0xff]
    %v443 = vld [vmem:[%s4] sm:$0xff]
    %v444 = vld [vmem:[%s4 + $0x8] sm:$0xff]
    %v445 = vld [vmem:[%s4 + $0x10] sm:$0xff]
    %v446 = vld [vmem:[%s4 + $0x18] sm:$0xff]
    %447 = vmatprep.subr.mxu0 0.0
    %448 = vmatpush1.msra.mxu0 0.0
    %449 = vmatprep.subr.mxu0 0.0
    %450 = vmatpush1.msra.mxu0 0.0
    %451 = vmatprep.subr.mxu0 0.0
    %452 = vmatpush1.msra.mxu0 0.0
    %453 = vmatprep.subr.mxu0 0.0
    %454 = vmatpush1.msra.mxu0 0.0
    %455 = vmatprep.subr.mxu0 0.0
    %456 = vmatpush1.msra.mxu0 0.0
    %457 = vmatprep.subr.mxu0 0.0
    %458 = vmatpush1.msra.mxu0 0.0
    %459 = vmatprep.subr.mxu0 0.0
    %460 = vmatpush1.msra.mxu0 0.0
    %461 = vmatprep.subr.mxu0 0.0
    %462 = vmatpush1.msra.mxu0 0.0
    %463 = vmatprep.subr.mxu0 0.0
    %464 = vmatpush1.msra.mxu0 0.0
    %465 = vmatprep.subr.mxu0 0.0
    %466 = vmatpush1.msra.mxu0 0.0
    %467 = vmatprep.subr.mxu0 0.0
    %468 = vmatpush1.msra.mxu0 0.0
    %469 = vmatprep.subr.mxu0 0.0
    %470 = vmatpush1.msra.mxu0 0.0
    %471 = vmatprep.subr.mxu0 0.0
    %472 = vmatpush1.msra.mxu0 %v446
    %473 = vmatprep.subr.mxu0 0.0
    %474 = vmatpush1.msra.mxu0 %v445
    %475 = vmatprep.subr.mxu0 0.0
    %476 = vmatpush1.msra.mxu0 %v444
    %477 = vmatprep.subr.mxu0 0.0
    %478 = vmatpush1.msra.mxu0 %v443
    %479 = vmatprep.subr.mxu0 0.0
    %480 = vmatpush2.msra.mxu0 0.0
    %481 = vmatprep.subr.mxu0 0.0
    %482 = vmatpush2.msra.mxu0 0.0
    %483 = vmatprep.subr.mxu0 0.0
    %484 = vmatpush2.msra.mxu0 0.0
    %485 = vmatprep.subr.mxu0 0.0
    %486 = vmatpush2.msra.mxu0 0.0
    %487 = vmatprep.subr.mxu0 0.0
    %488 = vmatpush2.msra.mxu0 0.0
    %489 = vmatprep.subr.mxu0 0.0
    %490 = vmatpush2.msra.mxu0 0.0
    %491 = vmatprep.subr.mxu0 0.0
    %492 = vmatpush2.msra.mxu0 0.0
    %493 = vmatprep.subr.mxu0 0.0
    %494 = vmatpush2.msra.mxu0 0.0
    %495 = vmatprep.subr.mxu0 0.0
    %496 = vmatpush2.msra.mxu0 0.0
    %497 = vmatprep.subr.mxu0 0.0
    %498 = vmatpush2.msra.mxu0 0.0
    %499 = vmatprep.subr.mxu0 0.0
    %500 = vmatpush2.msra.mxu0 0.0
    %501 = vmatprep.subr.mxu0 0.0
    %502 = vmatpush2.msra.mxu0 0.0
    %503 = vmatprep.subr.mxu0 0.0
    %504 = vmatpush2.msra.mxu0 0.0
    %505 = vmatprep.subr.mxu0 0.0
    %506 = vmatpush2.msra.mxu0 0.0
    %507 = vmatprep.subr.mxu0 0.0
    %508 = vmatpush2.msra.mxu0 0.0
    %509 = vmatprep.subr.mxu0 0.0
    %510 = vmatpush2.msra.mxu0 0.0
    %511 = vmatprep.mubr.f32.mxu0 0.0
    %512 = vmatmul.mubr.f32.gmra.mxu0 %v115
    %v513 = vpop.f32.mrf.mxu0
    %v514 = vadd.f32 0.0, %v513
    %v515 = vpop.f32.mrf.mxu0
    %516 = vmatprep.mubr.f32.mxu0 0.0
    %517 = vmatmul.mubr.f32.gmra.mxu0 %v277
    %v518 = vpop.f32.mrf.mxu0
    %v519 = vadd.f32 0.0, %v518
    %v520 = vpop.f32.mrf.mxu0
    %521 = vdwg.mxu0
    %v523 = vsel %vm32, %v437, 0
    %v526 = vsel %vm32, %v438, 0
    %528 = vmatprep.subr.mxu0 0.0
    %529 = vmatpush1.msra.mxu0 0.0
    %530 = vmatprep.subr.mxu0 0.0
    %531 = vmatpush1.msra.mxu0 0.0
    %532 = vmatprep.subr.mxu0 0.0
    %533 = vmatpush1.msra.mxu0 0.0
    %534 = vmatprep.subr.mxu0 0.0
    %535 = vmatpush1.msra.mxu0 0.0
    %536 = vmatprep.subr.mxu0 0.0
    %537 = vmatpush1.msra.mxu0 0.0
    %538 = vmatprep.subr.mxu0 0.0
    %539 = vmatpush1.msra.mxu0 0.0
    %540 = vmatprep.subr.mxu0 0.0
    %541 = vmatpush1.msra.mxu0 0.0
    %542 = vmatprep.subr.mxu0 0.0
    %543 = vmatpush1.msra.mxu0 0.0
    %544 = vmatprep.subr.mxu0 0.0
    %545 = vmatpush1.msra.mxu0 0.0
    %546 = vmatprep.subr.mxu0 0.0
    %547 = vmatpush1.msra.mxu0 0.0
    %548 = vmatprep.subr.mxu0 0.0
    %549 = vmatpush1.msra.mxu0 0.0
    %550 = vmatprep.subr.mxu0 0.0
    %551 = vmatpush1.msra.mxu0 0.0
    %552 = vmatprep.subr.mxu0 0.0
    %553 = vmatpush1.msra.mxu0 %v442
    %554 = vmatprep.subr.mxu0 0.0
    %555 = vmatpush1.msra.mxu0 %v441
    %556 = vmatprep.subr.mxu0 0.0
    %557 = vmatpush1.msra.mxu0 %v440
    %558 = vmatprep.subr.mxu0 0.0
    %559 = vmatpush1.msra.mxu0 %v439
    %560 = vmatprep.subr.mxu0 0.0
    %561 = vmatpush2.msra.mxu0 0.0
    %562 = vmatprep.subr.mxu0 0.0
    %563 = vmatpush2.msra.mxu0 0.0
    %564 = vmatprep.subr.mxu0 0.0
    %565 = vmatpush2.msra.mxu0 0.0
    %566 = vmatprep.subr.mxu0 0.0
    %567 = vmatpush2.msra.mxu0 0.0
    %568 = vmatprep.subr.mxu0 0.0
    %569 = vmatpush2.msra.mxu0 0.0
    %570 = vmatprep.subr.mxu0 0.0
    %571 = vmatpush2.msra.mxu0 0.0
    %572 = vmatprep.subr.mxu0 0.0
    %573 = vmatpush2.msra.mxu0 0.0
    %574 = vmatprep.subr.mxu0 0.0
    %575 = vmatpush2.msra.mxu0 0.0
    %576 = vmatprep.subr.mxu0 0.0
    %577 = vmatpush2.msra.mxu0 0.0
    %578 = vmatprep.subr.mxu0 0.0
    %579 = vmatpush2.msra.mxu0 0.0
    %580 = vmatprep.subr.mxu0 0.0
    %581 = vmatpush2.msra.mxu0 0.0
    %582 = vmatprep.subr.mxu0 0.0
    %583 = vmatpush2.msra.mxu0 0.0
    %584 = vmatprep.subr.mxu0 0.0
    %585 = vmatpush2.msra.mxu0 0.0
    %586 = vmatprep.subr.mxu0 0.0
    %587 = vmatpush2.msra.mxu0 0.0
    %588 = vmatprep.subr.mxu0 0.0
    %589 = vmatpush2.msra.mxu0 0.0
    %590 = vmatprep.subr.mxu0 0.0
    %591 = vmatpush2.msra.mxu0 0.0
    %592 = vmatprep.mubr.f32.mxu0 0.0
    %593 = vmatmul.mubr.f32.gmra.mxu0 %v523
    %v594 = vpop.f32.mrf.mxu0
    %v595 = vadd.f32 %v514, %v594
    %v596 = vpop.f32.mrf.mxu0
    %597 = vmatprep.mubr.f32.mxu0 0.0
    %598 = vmatmul.mubr.f32.gmra.mxu0 %v526
    %v599 = vpop.f32.mrf.mxu0
    %v600 = vadd.f32 %v519, %v599
    %v601 = vpop.f32.mrf.mxu0
    %602 = vdwg.mxu0
    %v603 = vld [vmem:[%s5] sm:$0x1]
    %v605 = vlaneseq
    %v606 = vshrl.u32 %v605, 7
    %v607 = vsub.s32 0, %v606
    %v608 = vrot.slane %v603, %v607
    %v610 = vadd.f32 %v595, %v608
    %v611 = vadd.f32 %v600, %v608
    %v612 = vtanh.pop %v610
    %v613 = vtanh.pop %v611
    %vm614 = vcmask 130048
    %615 = vst.msk [vmem:[#allocation3] sm:$0xff] %vm614, %v612
    %616 = vst.msk [vmem:[#allocation3 + $0x8] sm:$0xff] %vm614, %v613
    // Predicated region
    $region26: #{tpu_custom_call.1} parent=1 // pred_check
      _
    $region27: #{tpu_custom_call.1} parent=1 // pred_check_branch
      %618 = sbr.rel (0) target = $region29
    $region28: #{tpu_custom_call.1} parent=1 // pred_region
      %s620 = ssub.s32 256, 256
      %621 = vsyncadd [#allocation4], %s620
      %s622 = sshll.u32 [#allocation3], 4
      %s623 = int_to_ptr.vmem [resolvable:$true] %s622
      %628 = dma.vmem_to_hbm [thread:$0]  %s623, 256, %s6, [#allocation4], 128, 128, 8
    $region29: #{tpu_custom_call.1} parent=1 // pred_fallthru
      _
    // Predicated region
    $region30: #{tpu_custom_call.1} parent=1 // pred_check
      _
    $region31: #{tpu_custom_call.1} parent=1 // pred_check_branch
      %630 = sbr.rel (0) target = $region33
    $region32: #{tpu_custom_call.1} parent=1 // pred_region
      %631 = dma.done [#allocation4], 256
    $region33: #{tpu_custom_call.1} parent=1 // pred_fallthru
      _
    %632 = vsyncpa [#allocation4], 1

</llo_original>
